<compile_context>
chip_gen: v6e
topology: v6e:2x2x1
jax: 0.10.0
libtpu: 0.0.40
codegen_flags: <defaults>
</compile_context>

<pallas_src>
import jax
import jax.numpy as jnp
from jax.experimental import pallas as pl
from jax.experimental.pallas import tpu as pltpu

_FALLBACK_MAX_BATCH = 1 << 16     # below this, fused XLA GEMV already wins
_TARGET_BLOCK_ROWS = 8192         # rows of the (R, 256) view per grid step
                                  # -> 8 MiB in + 4 MiB out per step


def _linear_kernel(x_ref, s_ref, b_ref, o_ref):
    # x_ref: (tr, 128*IN) f32 VMEM -- 128 samples per row, features interleaved
    # s_ref: (128*IN, 128) f32 VMEM -- constant selector, S[IN*k+i, k] = w[i]
    # b_ref: (1,)          f32 SMEM -- bias scalar
    # o_ref: (tr, 128)     f32 VMEM -- lane-dense y for the same 128*tr samples
    o_ref[...] = (jnp.dot(x_ref[...], s_ref[...],
                          preferred_element_type=jnp.float32)
                  + b_ref[0]).astype(o_ref.dtype)


def _jax_linear(x, w, b):
    # Elementwise formulation keeps full f32 precision regardless of XLA's
    # default (bf16) matmul precision on TPU.
    return jnp.sum(x * w[0][None, :], axis=-1, keepdims=True) + b


def pallas_linear(x, w, b, *, block_rows=None, force_pallas=False):
    """x: (B, IN) f32, w: (1, IN) f32, b: (1,) f32 -> (B, 1) f32."""
    B, IN = x.shape
    OUT, IN_w = w.shape
    assert IN == IN_w and OUT == 1, "Net spec is nn.Linear(2, 1)"

    x = x.astype(jnp.float32)
    w = w.astype(jnp.float32)
    b = b.astype(jnp.float32).reshape(OUT)

    # Small batches: the pallas_call would be 100% launch/step overhead.
    if B < _FALLBACK_MAX_BATCH and not force_pallas:
        return _jax_linear(x, w, b)

    lanes_in = 128 * IN                       # 256 input lanes per row
    b_pad = -(-B // 128) * 128                # pad batch only to next 128
    flat = x.reshape(-1)                      # free row-major reshape
    if b_pad != B:
        # Only taken when B % 128 != 0 (one extra pass over x in that case).
        flat = jnp.pad(flat, (0, IN * (b_pad - B)))
    nrows = b_pad // 128
    xv = flat.reshape(nrows, lanes_in)        # free reshape: 128 samples / row

    # Biggest dense tile that keeps the double-buffered working set ~24 MiB
    # (fits v7x's 64 MiB physical VMEM with headroom) and moves ~12 MiB of
    # HBM traffic per grid step.
    tr = min(block_rows or _TARGET_BLOCK_ROWS, _TARGET_BLOCK_ROWS, nrows)
    if tr < nrows:                            # (8,128) rule: multiple of 8 ...
        tr = max(8, (tr // 8) * 8)            # ... unless block == full array

    # Constant selector folding weighting + deinterleave + compaction into a
    # single MXU pass: out[:, k] = sum_i x_row[IN*k + i] * w[i].
    rows = jnp.arange(lanes_in)
    cols = jnp.arange(128)
    vals = w[0, rows % IN]
    sel = jnp.where((rows[:, None] // IN) == cols[None, :],
                    vals[:, None], 0.0).astype(jnp.float32)

    out = pl.pallas_call(
        _linear_kernel,
        out_shape=jax.ShapeDtypeStruct((nrows, 128), jnp.float32),
        grid=(pl.cdiv(nrows, tr),),
        in_specs=[
            pl.BlockSpec((tr, lanes_in), lambda i: (i, 0)),
            pl.BlockSpec((lanes_in, 128), lambda i: (0, 0)),
            pl.BlockSpec(memory_space=pltpu.MemorySpace.SMEM),
        ],
        out_specs=pl.BlockSpec((tr, 128), lambda i: (i, 0)),
        compiler_params=pltpu.CompilerParams(
            dimension_semantics=("parallel",),
            vmem_limit_bytes=40 * 1024 * 1024),
    )(xv, sel, b)

    # (R,128) row-major is already y in sample order: free reshape, drop pad.
    return out.reshape(b_pad)[:B].reshape(B, OUT)


if __name__ == "__main__":
    key = jax.random.PRNGKey(0)
    k_w, k_b, k1, k2, k3, k4 = jax.random.split(key, 6)

    IN_F, OUT_F = 2, 1
    bound = 1.0 / (IN_F ** 0.5)   # PyTorch nn.Linear default init range
    w = jax.random.uniform(k_w, (OUT_F, IN_F), dtype=jnp.float32,
                           minval=-bound, maxval=bound)
    b = jax.random.uniform(k_b, (OUT_F,), dtype=jnp.float32,
                           minval=-bound, maxval=bound)

    def check(x, **kw):
        out = jax.block_until_ready(pallas_linear(x, w, b, **kw))
        ref = x[:, 0:1] * w[0, 0] + x[:, 1:2] * w[0, 1] + b[0]
        assert out.shape == ref.shape, (out.shape, ref.shape)
        err = float(jnp.max(jnp.abs(out - ref)))
        assert jnp.allclose(out, ref, atol=1e-4, rtol=1e-4), err

    # 1) demo size -> small-batch JAX fallback path
    check(jax.random.normal(k1, (8, IN_F), dtype=jnp.float32))
    # 2) Pallas path, batch not a multiple of 128 (pad-to-128, single block)
    check(jax.random.normal(k2, (300, IN_F), dtype=jnp.float32),
          force_pallas=True)
    # 3) Pallas path, multi-step pipelined grid with a ragged last block
    check(jax.random.normal(k3, (128 * 1000, IN_F), dtype=jnp.float32),
          force_pallas=True, block_rows=256)
    # 4) Pallas path with the production tile size
    check(jax.random.normal(k4, (1 << 18, IN_F), dtype=jnp.float32))

    print("KERNEL_OK")
</pallas_src>

<mosaic_0001>
module attributes {stable_mosaic.version = 11 : i64} {
  func.func @_linear_kernel(%arg0: i32, %arg1: memref<3x256xf32, #tpu.memory_space<vmem>>, %arg2: memref<256x128xf32, #tpu.memory_space<vmem>>, %arg3: memref<1xf32, #tpu.memory_space<smem>>, %arg4: memref<3x128xf32, #tpu.memory_space<vmem>>) attributes {dimension_semantics = [#tpu.dimension_semantics<parallel>], iteration_bounds = array<i64: 1>, scalar_prefetch = 0 : i64, scratch_operands = 0 : i64, tpu.core_type = #tpu.core_type<tc>, window_params = [{transform_indices = @transform_0, window_bounds = array<i64: 3, 256>}, {pipeline_mode = #tpu.pipeline_mode<synchronous>, transform_indices = @transform_1, window_bounds = array<i64: 256, 128>}, {transform_indices = @transform_2, window_bounds = array<i64: 1>}, {transform_indices = @transform_3, window_bounds = array<i64: 3, 128>}]} {
    %c0 = arith.constant 0 : index
    %c0_0 = arith.constant 0 : index
    %0 = vector.load %arg1[%c0, %c0_0] : memref<3x256xf32, #tpu.memory_space<vmem>>, vector<3x256xf32>
    %c0_1 = arith.constant 0 : index
    %c0_2 = arith.constant 0 : index
    %1 = vector.load %arg2[%c0_1, %c0_2] : memref<256x128xf32, #tpu.memory_space<vmem>>, vector<256x128xf32>
    %cst = arith.constant dense<0.000000e+00> : vector<3x128xf32>
    %2 = tpu.matmul %0, %1, %cst {dimension_numbers = #tpu.dot_dimension_numbers<[1], [0], [0], [1], [0, 0, 1, 1], [], []>} : vector<3x256xf32>, vector<256x128xf32>, vector<3x128xf32> -> vector<3x128xf32>
    %c0_3 = arith.constant 0 : index
    %3 = memref.load %arg3[%c0_3] : memref<1xf32, #tpu.memory_space<smem>>
    %4 = vector.broadcast %3 : f32 to vector<3x128xf32>
    %5 = arith.addf %2, %4 : vector<3x128xf32>
    %c0_4 = arith.constant 0 : index
    %c0_5 = arith.constant 0 : index
    %6 = vector.load %arg4[%c0_4, %c0_5] : memref<3x128xf32, #tpu.memory_space<vmem>>, vector<3x128xf32>
    tpu.vector_store %arg4[%c0_4, %c0_5], %5 {strides = array<i32>} : memref<3x128xf32, #tpu.memory_space<vmem>>, vector<3x128xf32>,
    return
  }
  func.func @transform_0(%arg0: i32) -> (i32, i32) {
    %c0_i32 = arith.constant 0 : i32
    %c0_i32_0 = arith.constant 0 : i32
    return %arg0, %c0_i32 : i32, i32
  }
  func.func @transform_1(%arg0: i32) -> (i32, i32) {
    %c0_i32 = arith.constant 0 : i32
    %c0_i32_0 = arith.constant 0 : i32
    %c0_i32_1 = arith.constant 0 : i32
    return %c0_i32, %c0_i32_0 : i32, i32
  }
  func.func @transform_2(%arg0: i32) -> i32 {
    %c0_i32 = arith.constant 0 : i32
    %c0_i32_0 = arith.constant 0 : i32
    return %c0_i32 : i32
  }
  func.func @transform_3(%arg0: i32) -> (i32, i32) {
    %c0_i32 = arith.constant 0 : i32
    %c0_i32_0 = arith.constant 0 : i32
    return %arg0, %c0_i32 : i32, i32
  }
}

</mosaic_0001>

<llo_original>
// kernel: tpu_custom_call.1
$region0: #{tpu_custom_call.1}
  #allocation0 [shape = 'u32[]', space=smem, size = 0x4, offset = 0x4, fixed_abs, tag = 'smem constant byte address 0x4 - core index']
  #allocation1 [shape = 'u32[144,128]{1,0:T(1,128)}', space=vmem, size = 0x12000, scoped, tag = 'internal scratch']
  #allocation2 [shape = 'f32[1]{0:T(128)S(6)}', space=smem, size = 0x200, scoped, tag = 'scoped memory for tpu_custom_call.1']
  %s0 = inlined_call_operand.hbm [shape: f32[3,256], index: 0, kind: input, shape index: {}]
  %s1 = inlined_call_operand.hbm [shape: f32[256,128], index: 1, kind: input, shape index: {}]
  %s2 = inlined_call_operand.<no memory space> [shape: f32[1], index: 2, kind: input, shape index: {}]
  %s3 = inlined_call_operand.hbm [shape: f32[3,128], index: 3, kind: output, shape index: {}]
  %s4 = sld [smem:[#allocation0]]
  $region30: #{tpu_custom_call.1} parent=0
    _
  %s6 = ssub.s32 1, %s4
  %s7 = scalar_select 0, %s6, %s4
  %8 = sst [smem:[#allocation2]] %s2
  $region1: #{tpu_custom_call.1} parent=0
    #allocation3 [shape = 'u8[4096]{0}', space=vmem, size = 0x1000, scoped, tag = 'input window, operand 0, single buffered']
    #allocation4 [shape = 's32[1]{0}', space=sflag, size = 0x4, scoped, tag = 'scoped memory for tpu_custom_call.1']
    #allocation5 [shape = 's32[1]{0}', space=sflag, size = 0x4, scoped, tag = 'scoped memory for tpu_custom_call.1']
    #allocation6 [shape = 'u8[131072]{0}', space=vmem, size = 0x20000, scoped, tag = 'input window, operand 1, single buffered']
    #allocation7 [shape = 's32[1]{0}', space=sflag, size = 0x4, scoped, tag = 'scoped memory for tpu_custom_call.1']
    #allocation8 [shape = 'u8[2048]{0}', space=vmem, size = 0x800, scoped, tag = 'output window, operand 0, single buffered']
    %9 = vsyncpa [#allocation4], 0
    %10 = vsyncpa [#allocation7], 0
    %11 = vsyncpa [#allocation5], 0
    // Predicated region
    $region2: #{tpu_custom_call.1} parent=1 // pred_check
      _
    $region3: #{tpu_custom_call.1} parent=1 // pred_check_branch
      %13 = sbr.rel (0) target = $region5
    $region4: #{tpu_custom_call.1} parent=1 // pred_region
      %s15 = ssub.s32 128, 128
      %16 = vsyncadd [#allocation4], %s15
      %s18 = sshll.u32 [#allocation3], 4
      %s19 = int_to_ptr.vmem [resolvable:$true] %s18
      %21 = dma.hbm_to_vmem [thread:$0]  %s0, 128, %s19, [#allocation4]
    $region5: #{tpu_custom_call.1} parent=1 // pred_fallthru
      _
    // Predicated region
    $region6: #{tpu_custom_call.1} parent=1 // pred_check
      _
    $region7: #{tpu_custom_call.1} parent=1 // pred_check_branch
      %23 = sbr.rel (0) target = $region9
    $region8: #{tpu_custom_call.1} parent=1 // pred_region
      %s25 = ssub.s32 4096, 4096
      %26 = vsyncadd [#allocation7], %s25
      %s27 = sshll.u32 [#allocation6], 4
      %s28 = int_to_ptr.vmem [resolvable:$true] %s27
      %33 = dma.hbm_to_vmem [thread:$0]  %s1, 4096, %s28, [#allocation7], 128, 128, 8
    $region9: #{tpu_custom_call.1} parent=1 // pred_fallthru
      _
    // Predicated region
    $region10: #{tpu_custom_call.1} parent=1 // pred_check
      _
    $region11: #{tpu_custom_call.1} parent=1 // pred_check_branch
      %35 = sbr.rel (0) target = $region13
    $region12: #{tpu_custom_call.1} parent=1 // pred_region
      _
    $region13: #{tpu_custom_call.1} parent=1 // pred_fallthru
      _
    // Predicated region
    $region14: #{tpu_custom_call.1} parent=1 // pred_check
      _
    $region15: #{tpu_custom_call.1} parent=1 // pred_check_branch
      %37 = sbr.rel (0) target = $region17
    $region16: #{tpu_custom_call.1} parent=1 // pred_region
      %38 = dma.done [#allocation4], 128
    $region17: #{tpu_custom_call.1} parent=1 // pred_fallthru
      _
    // Predicated region
    $region18: #{tpu_custom_call.1} parent=1 // pred_check
      _
    $region19: #{tpu_custom_call.1} parent=1 // pred_check_branch
      %40 = sbr.rel (0) target = $region21
    $region20: #{tpu_custom_call.1} parent=1 // pred_region
      %41 = dma.done [#allocation7], 4096
    $region21: #{tpu_custom_call.1} parent=1 // pred_fallthru
      _
    %v42 = vld [vmem:[#allocation3] sm:$0x77]
    %v43 = vld [vmem:[#allocation6] sm:$0xff]
    %v44 = vld [vmem:[#allocation6 + $0x8] sm:$0xff]
    %v45 = vld [vmem:[#allocation6 + $0x10] sm:$0xff]
    %v46 = vld [vmem:[#allocation6 + $0x18] sm:$0xff]
    %v47 = vld [vmem:[#allocation6 + $0x20] sm:$0xff]
    %v48 = vld [vmem:[#allocation6 + $0x28] sm:$0xff]
    %v49 = vld [vmem:[#allocation6 + $0x30] sm:$0xff]
    %v50 = vld [vmem:[#allocation6 + $0x38] sm:$0xff]
    %v51 = vld [vmem:[#allocation6 + $0x40] sm:$0xff]
    %v52 = vld [vmem:[#allocation6 + $0x48] sm:$0xff]
    %v53 = vld [vmem:[#allocation6 + $0x50] sm:$0xff]
    %v54 = vld [vmem:[#allocation6 + $0x58] sm:$0xff]
    %v55 = vld [vmem:[#allocation6 + $0x60] sm:$0xff]
    %v56 = vld [vmem:[#allocation6 + $0x68] sm:$0xff]
    %v57 = vld [vmem:[#allocation6 + $0x70] sm:$0xff]
    %v58 = vld [vmem:[#allocation6 + $0x78] sm:$0xff]
    %v59 = vld [vmem:[#allocation6 + $0x80] sm:$0xff]
    %v60 = vld [vmem:[#allocation6 + $0x88] sm:$0xff]
    %v61 = vld [vmem:[#allocation6 + $0x90] sm:$0xff]
    %v62 = vld [vmem:[#allocation6 + $0x98] sm:$0xff]
    %v63 = vld [vmem:[#allocation6 + $0xa0] sm:$0xff]
    %v64 = vld [vmem:[#allocation6 + $0xa8] sm:$0xff]
    %v65 = vld [vmem:[#allocation6 + $0xb0] sm:$0xff]
    %v66 = vld [vmem:[#allocation6 + $0xb8] sm:$0xff]
    %v67 = vld [vmem:[#allocation6 + $0xc0] sm:$0xff]
    %v68 = vld [vmem:[#allocation6 + $0xc8] sm:$0xff]
    %v69 = vld [vmem:[#allocation6 + $0xd0] sm:$0xff]
    %v70 = vld [vmem:[#allocation6 + $0xd8] sm:$0xff]
    %v71 = vld [vmem:[#allocation6 + $0xe0] sm:$0xff]
    %v72 = vld [vmem:[#allocation6 + $0xe8] sm:$0xff]
    %v73 = vld [vmem:[#allocation6 + $0xf0] sm:$0xff]
    %v74 = vld [vmem:[#allocation6 + $0xf8] sm:$0xff]
    %s75 = sld [smem:[#allocation2]]
    %v76 = vstv %s75
    %v78 = vcombine.high %v42, %v42
    %80 = vmatprep.subr.mxu0 0.0
    %81 = vmatpush1.msra.mxu0 %v58
    %82 = vmatprep.subr.mxu0 0.0
    %83 = vmatpush1.msra.mxu0 %v57
    %84 = vmatprep.subr.mxu0 0.0
    %85 = vmatpush1.msra.mxu0 %v56
    %86 = vmatprep.subr.mxu0 0.0
    %87 = vmatpush1.msra.mxu0 %v55
    %88 = vmatprep.subr.mxu0 0.0
    %89 = vmatpush1.msra.mxu0 %v54
    %90 = vmatprep.subr.mxu0 0.0
    %91 = vmatpush1.msra.mxu0 %v53
    %92 = vmatprep.subr.mxu0 0.0
    %93 = vmatpush1.msra.mxu0 %v52
    %94 = vmatprep.subr.mxu0 0.0
    %95 = vmatpush1.msra.mxu0 %v51
    %96 = vmatprep.subr.mxu0 0.0
    %97 = vmatpush1.msra.mxu0 %v50
    %98 = vmatprep.subr.mxu0 0.0
    %99 = vmatpush1.msra.mxu0 %v49
    %100 = vmatprep.subr.mxu0 0.0
    %101 = vmatpush1.msra.mxu0 %v48
    %102 = vmatprep.subr.mxu0 0.0
    %103 = vmatpush1.msra.mxu0 %v47
    %104 = vmatprep.subr.mxu0 0.0
    %105 = vmatpush1.msra.mxu0 %v46
    %106 = vmatprep.subr.mxu0 0.0
    %107 = vmatpush1.msra.mxu0 %v45
    %108 = vmatprep.subr.mxu0 0.0
    %109 = vmatpush1.msra.mxu0 %v44
    %110 = vmatprep.subr.mxu0 0.0
    %111 = vmatpush1.msra.mxu0 %v43
    %112 = vmatprep.subr.mxu0 0.0
    %113 = vmatpush2.msra.mxu0 %v74
    %114 = vmatprep.subr.mxu0 0.0
    %115 = vmatpush2.msra.mxu0 %v73
    %116 = vmatprep.subr.mxu0 0.0
    %117 = vmatpush2.msra.mxu0 %v72
    %118 = vmatprep.subr.mxu0 0.0
    %119 = vmatpush2.msra.mxu0 %v71
    %120 = vmatprep.subr.mxu0 0.0
    %121 = vmatpush2.msra.mxu0 %v70
    %122 = vmatprep.subr.mxu0 0.0
    %123 = vmatpush2.msra.mxu0 %v69
    %124 = vmatprep.subr.mxu0 0.0
    %125 = vmatpush2.msra.mxu0 %v68
    %126 = vmatprep.subr.mxu0 0.0
    %127 = vmatpush2.msra.mxu0 %v67
    %128 = vmatprep.subr.mxu0 0.0
    %129 = vmatpush2.msra.mxu0 %v66
    %130 = vmatprep.subr.mxu0 0.0
    %131 = vmatpush2.msra.mxu0 %v65
    %132 = vmatprep.subr.mxu0 0.0
    %133 = vmatpush2.msra.mxu0 %v64
    %134 = vmatprep.subr.mxu0 0.0
    %135 = vmatpush2.msra.mxu0 %v63
    %136 = vmatprep.subr.mxu0 0.0
    %137 = vmatpush2.msra.mxu0 %v62
    %138 = vmatprep.subr.mxu0 0.0
    %139 = vmatpush2.msra.mxu0 %v61
    %140 = vmatprep.subr.mxu0 0.0
    %141 = vmatpush2.msra.mxu0 %v60
    %142 = vmatprep.subr.mxu0 0.0
    %143 = vmatpush2.msra.mxu0 %v59
    %144 = vmatprep.mubr.f32.mxu0 %v78
    %145 = vmatmul.mubr.f32.gmra.mxu0 %v42
    %v146 = vpop.f32.mrf.mxu0
    %v147 = vadd.f32 %v76, %v146
    %v148 = vpop.f32.mrf.mxu0
    %149 = vdwg.mxu0
    %150 = vst [vmem:[#allocation8] sm:$0x7] %v147
    // Predicated region
    $region22: #{tpu_custom_call.1} parent=1 // pred_check
      _
    $region23: #{tpu_custom_call.1} parent=1 // pred_check_branch
      %152 = sbr.rel (0) target = $region25
    $region24: #{tpu_custom_call.1} parent=1 // pred_region
      %s154 = ssub.s32 64, 64
      %155 = vsyncadd [#allocation5], %s154
      %s157 = sshll.u32 [#allocation8], 4
      %s158 = int_to_ptr.vmem [resolvable:$true] %s157
      %160 = dma.vmem_to_hbm [thread:$0]  %s158, 64, %s3, [#allocation5]
    $region25: #{tpu_custom_call.1} parent=1 // pred_fallthru
      _
    // Predicated region
    $region26: #{tpu_custom_call.1} parent=1 // pred_check
      _
    $region27: #{tpu_custom_call.1} parent=1 // pred_check_branch
      %162 = sbr.rel (0) target = $region29
    $region28: #{tpu_custom_call.1} parent=1 // pred_region
      %163 = dma.done [#allocation5], 64
    $region29: #{tpu_custom_call.1} parent=1 // pred_fallthru
      _
    %164 = vsyncpa [#allocation4], 1
    %165 = vsyncpa [#allocation7], 1
    %166 = vsyncpa [#allocation5], 1

</llo_original>
